<compile_context>
chip_gen: v7x
topology: tpu7x:2x2x1
jax: 0.10.0
libtpu: 0.0.40
codegen_flags: <defaults>
</compile_context>

<pallas_src>
import functools
import math

import jax
import jax.numpy as jnp
from jax.experimental import pallas as pl
from jax.experimental.pallas import tpu as pltpu


def attention_film_kernel(x_ref, key_ref, value_ref, wq_ref, wu_ref, bu_ref,
                          o_ref, *, inv_hw, inv_sqrt_c):
    # One grid step handles a block of `bb` batch elements: (bb, C, HW_pad).
    C = wq_ref.shape[0]

    x_nat = x_ref[...]                                          # (bb, C, HWp) native dtype

    # Spatial mean -> per-image prototype, (bb, C) with C on lanes.
    # f32 accumulation; padded lanes (if any) are zeros so they don't bias it.
    proto_x = jnp.sum(x_nat, axis=-1, dtype=jnp.float32) * inv_hw   # (bb, C)

    # Query projection for the whole batch block.
    query = jnp.dot(proto_x, wq_ref[...],
                    preferred_element_type=jnp.float32)          # (bb, C)

    # Scaled dot-product attention over the N support prototypes:
    # query @ key^T without materializing the transpose.
    corr = jax.lax.dot_general(
        query, key_ref[...], (((1,), (1,)), ((), ())),
        preferred_element_type=jnp.float32) * inv_sqrt_c          # (bb, N)
    corr = corr - jnp.max(corr, axis=-1, keepdims=True)
    p = jnp.exp(corr)
    p = p / jnp.sum(p, axis=-1, keepdims=True)   # exact divide; (bb, N) is tiny

    agg = jnp.dot(p, value_ref[...],
                  preferred_element_type=jnp.float32)             # (bb, C)

    # fc_update as ONE matmul on the lane-concat [proto_x | agg].
    film = jnp.dot(jnp.concatenate([proto_x, agg], axis=-1), wu_ref[...],
                   preferred_element_type=jnp.float32) + bu_ref[...]   # (bb, 2C)

    # FiLM apply at x's native dtype; lane-dense (C, HW_pad) store.
    gamma = film[:, :C].astype(x_nat.dtype)[:, :, None]           # (bb, C, 1)
    beta = film[:, C:].astype(x_nat.dtype)[:, :, None]            # (bb, C, 1)
    o_ref[...] = (gamma * x_nat + beta).astype(o_ref.dtype)


def _pick_batch_block(B, C, HW, itemsize, target_block_bytes=1 << 20):
    """Pick a batch block: ~0.5-2 MiB per block, >=2 grid steps (>=4 when the
    batch allows) so both v7x TensorCores get work and the pipeline has depth,
    multiple of 8 when >=8 (sublane-aligned (bb, C) intermediates)."""
    per_image = max(1, C * HW * itemsize)
    bb = max(1, min(B, target_block_bytes // per_image))
    min_steps = 4 if B >= 4 else (2 if B >= 2 else 1)
    bb = min(bb, max(1, B // min_steps))
    if bb >= 8:
        bb -= bb % 8
    bb = max(1, bb)
    while B % bb:            # must divide B
        bb -= 1
    return bb


def attention_module_pallas(x, proto_spt, wq, wk, wv, wu, bu,
                            *, batch_block=None):
    """x: (B, C, H, W) NCHW; proto_spt: (N, C); Linear weights pre-transposed
    to (in, out) so that y = x @ W."""
    B, C, H, W = x.shape
    HW = H * W
    N = proto_spt.shape[0]
    itemsize = jnp.dtype(x.dtype).itemsize

    # Structural limit: the spatial mean needs a full (C, HW) plane per image
    # in one block.  Keep a single image well under the per-block VMEM budget
    # (v7x has only 64 MiB physical VMEM; double-buffered in+out ~= 4x block).
    # TODO(synk): switch to a two-pass structure (tiled HW-mean into a (B, C)
    # scratch, then a tiled FiLM apply) if C*HW ever exceeds this budget.
    assert C * HW * itemsize <= 6 * (1 << 20), (
        "image plane too large for single-block mean; use a two-pass kernel")

    if batch_block is None:
        batch_block = _pick_batch_block(B, C, HW, itemsize)
    assert B % batch_block == 0, "batch_block must divide B"

    # Lane-dense output store: pad HW up to a multiple of 128 (zeros don't
    # affect the mean because we divide by the real HW; the padded columns of
    # the output are sliced off below).
    HW_pad = ((HW + 127) // 128) * 128
    x2 = x.reshape(B, C, HW)
    if HW_pad != HW:
        x2 = jnp.pad(x2, ((0, 0), (0, 0), (0, HW_pad - HW)))

    # Grid-invariant support projections: computed ONCE here, not per grid
    # step.  [key | value] = proto_spt @ [Wk | Wv] is a single tiny matmul.
    kv = jnp.dot(proto_spt.astype(jnp.float32),
                 jnp.concatenate([wk, wv], axis=1).astype(jnp.float32))
    key_spt = kv[:, :C]                                   # (N, C) f32
    value_spt = kv[:, C:]                                  # (N, C) f32

    wq32 = wq.astype(jnp.float32)
    wu32 = wu.astype(jnp.float32)
    bu2 = bu.reshape(1, 2 * C).astype(jnp.float32)

    kernel = functools.partial(attention_film_kernel,
                               inv_hw=1.0 / HW,
                               inv_sqrt_c=1.0 / math.sqrt(C))

    out = pl.pallas_call(
        kernel,
        out_shape=jax.ShapeDtypeStruct((B, C, HW_pad), x.dtype),
        grid_spec=pltpu.PrefetchScalarGridSpec(
            num_scalar_prefetch=0,
            grid=(B // batch_block,),
            in_specs=[
                pl.BlockSpec((batch_block, C, HW_pad), lambda b: (b, 0, 0)),  # x
                pl.BlockSpec((N, C), lambda b: (0, 0)),                       # key
                pl.BlockSpec((N, C), lambda b: (0, 0)),                       # value
                pl.BlockSpec((C, C), lambda b: (0, 0)),                       # Wq
                pl.BlockSpec((2 * C, 2 * C), lambda b: (0, 0)),               # Wu
                pl.BlockSpec((1, 2 * C), lambda b: (0, 0)),                   # bu
            ],
            out_specs=pl.BlockSpec((batch_block, C, HW_pad),
                                   lambda b: (b, 0, 0)),
        ),
        compiler_params=pltpu.CompilerParams(
            dimension_semantics=("parallel",)),
    )(x2, key_spt, value_spt, wq32, wu32, bu2)

    if HW_pad != HW:
        out = out[:, :, :HW]
    return out.reshape(B, C, H, W)


def attention_module_reference(x, proto_spt, wq, wk, wv, wu, bu):
    """Pure-JAX reference mirroring the PyTorch forward."""
    B, C, H, W = x.shape
    proto_x = x.mean(axis=(2, 3))                              # (B, C)
    query = proto_x @ wq                                       # (B, C)
    key = proto_spt @ wk                                       # (N, C)
    value = proto_spt @ wv                                     # (N, C)
    corr = (query @ key.T) / math.sqrt(C)                      # (B, N)
    corr = jax.nn.softmax(corr, axis=-1)
    agg = corr @ value                                         # (B, C)
    film = jnp.concatenate([proto_x, agg], axis=-1) @ wu + bu  # (B, 2C)
    gamma = film[:, :C][:, :, None, None]
    beta = film[:, C:][:, :, None, None]
    return gamma * x + beta


if __name__ == "__main__":
    B, C, H, W = 2, 32, 16, 16   # hidden_size = C = 32
    N_SPT = 8                    # number of support prototypes

    key = jax.random.PRNGKey(0)
    kx, ks, k1, k2, k3, k4, k5 = jax.random.split(key, 7)

    x = jax.random.normal(kx, (B, C, H, W), dtype=jnp.float32)
    proto_spt = jax.random.normal(ks, (N_SPT, C), dtype=jnp.float32)

    # Deterministic synthetic params; stored as (in, out) i.e. PyTorch W^T.
    wq = jax.random.normal(k1, (C, C), dtype=jnp.float32) * (1.0 / math.sqrt(C))
    wk = jax.random.normal(k2, (C, C), dtype=jnp.float32) * (1.0 / math.sqrt(C))
    wv = jax.random.normal(k3, (C, C), dtype=jnp.float32) * (1.0 / math.sqrt(C))
    wu = jax.random.normal(k4, (2 * C, 2 * C), dtype=jnp.float32) * (1.0 / math.sqrt(2 * C))
    bu = jax.random.normal(k5, (2 * C,), dtype=jnp.float32) * 0.1

    out = attention_module_pallas(x, proto_spt, wq, wk, wv, wu, bu)
    out = jax.block_until_ready(out)

    ref = attention_module_reference(x, proto_spt, wq, wk, wv, wu, bu)
    assert out.shape == (B, C, H, W)
    assert jnp.allclose(out, ref, atol=2e-3, rtol=2e-3), "mismatch vs reference"

    print("KERNEL_OK")
</pallas_src>

<mosaic_0001>
module attributes {stable_mosaic.version = 11 : i64} {
  func.func @attention_film_kernel(%arg0: i32, %arg1: memref<1x32x256xf32, #tpu.memory_space<vmem>>, %arg2: memref<8x32xf32, #tpu.memory_space<vmem>>, %arg3: memref<8x32xf32, #tpu.memory_space<vmem>>, %arg4: memref<32x32xf32, #tpu.memory_space<vmem>>, %arg5: memref<64x64xf32, #tpu.memory_space<vmem>>, %arg6: memref<1x64xf32, #tpu.memory_space<vmem>>, %arg7: memref<1x32x256xf32, #tpu.memory_space<vmem>>) attributes {dimension_semantics = [#tpu.dimension_semantics<parallel>], iteration_bounds = array<i64: 2>, scalar_prefetch = 0 : i64, scratch_operands = 0 : i64, tpu.core_type = #tpu.core_type<tc>, window_params = [{transform_indices = @transform_0, window_bounds = array<i64: 1, 32, 256>}, {pipeline_mode = #tpu.pipeline_mode<synchronous>, transform_indices = @transform_1, window_bounds = array<i64: 8, 32>}, {pipeline_mode = #tpu.pipeline_mode<synchronous>, transform_indices = @transform_2, window_bounds = array<i64: 8, 32>}, {pipeline_mode = #tpu.pipeline_mode<synchronous>, transform_indices = @transform_3, window_bounds = array<i64: 32, 32>}, {pipeline_mode = #tpu.pipeline_mode<synchronous>, transform_indices = @transform_4, window_bounds = array<i64: 64, 64>}, {pipeline_mode = #tpu.pipeline_mode<synchronous>, transform_indices = @transform_5, window_bounds = array<i64: 1, 64>}, {transform_indices = @transform_6, window_bounds = array<i64: 1, 32, 256>}]} {
    %c0 = arith.constant 0 : index
    %c0_0 = arith.constant 0 : index
    %c0_1 = arith.constant 0 : index
    %0 = vector.load %arg1[%c0, %c0_0, %c0_1] : memref<1x32x256xf32, #tpu.memory_space<vmem>>, vector<1x32x256xf32>
    %cst = arith.constant dense<0.000000e+00> : vector<1x32xf32>
    %1 = vector.multi_reduction <add>, %0, %cst [2] : vector<1x32x256xf32> to vector<1x32xf32>
    %cst_2 = arith.constant 3.906250e-03 : f32
    %2 = vector.broadcast %cst_2 : f32 to vector<1x32xf32>
    %3 = arith.mulf %1, %2 : vector<1x32xf32>
    %c0_3 = arith.constant 0 : index
    %c0_4 = arith.constant 0 : index
    %4 = vector.load %arg4[%c0_3, %c0_4] : memref<32x32xf32, #tpu.memory_space<vmem>>, vector<32x32xf32>
    %cst_5 = arith.constant dense<0.000000e+00> : vector<1x32xf32>
    %5 = tpu.matmul %3, %4, %cst_5 {dimension_numbers = #tpu.dot_dimension_numbers<[1], [0], [0], [1], [0, 0, 1, 1], [], []>} : vector<1x32xf32>, vector<32x32xf32>, vector<1x32xf32> -> vector<1x32xf32>
    %c0_6 = arith.constant 0 : index
    %c0_7 = arith.constant 0 : index
    %6 = vector.load %arg2[%c0_6, %c0_7] : memref<8x32xf32, #tpu.memory_space<vmem>>, vector<8x32xf32>
    %cst_8 = arith.constant dense<0.000000e+00> : vector<1x8xf32>
    %7 = tpu.matmul %5, %6, %cst_8 {dimension_numbers = #tpu.dot_dimension_numbers<[1], [1], [0], [0], [0, 0, 1, 0], [], []>} : vector<1x32xf32>, vector<8x32xf32>, vector<1x8xf32> -> vector<1x8xf32>
    %cst_9 = arith.constant 0.176776692 : f32
    %8 = vector.broadcast %cst_9 : f32 to vector<1x8xf32>
    %9 = arith.mulf %7, %8 : vector<1x8xf32>
    %cst_10 = arith.constant dense<0xFF800000> : vector<1xf32>
    %10 = vector.multi_reduction <maximumf>, %9, %cst_10 [1] : vector<1x8xf32> to vector<1xf32>
    %11 = vector.shape_cast %10 : vector<1xf32> to vector<1x1xf32>
    %12 = vector.broadcast %11 : vector<1x1xf32> to vector<1x8xf32>
    %13 = arith.subf %9, %12 : vector<1x8xf32>
    %14 = math.exp %13 : vector<1x8xf32>
    %cst_11 = arith.constant dense<0.000000e+00> : vector<1xf32>
    %15 = vector.multi_reduction <add>, %14, %cst_11 [1] : vector<1x8xf32> to vector<1xf32>
    %16 = vector.shape_cast %15 : vector<1xf32> to vector<1x1xf32>
    %17 = vector.broadcast %16 : vector<1x1xf32> to vector<1x8xf32>
    %18 = arith.divf %14, %17 : vector<1x8xf32>
    %c0_12 = arith.constant 0 : index
    %c0_13 = arith.constant 0 : index
    %19 = vector.load %arg3[%c0_12, %c0_13] : memref<8x32xf32, #tpu.memory_space<vmem>>, vector<8x32xf32>
    %cst_14 = arith.constant dense<0.000000e+00> : vector<1x32xf32>
    %20 = tpu.matmul %18, %19, %cst_14 {dimension_numbers = #tpu.dot_dimension_numbers<[1], [0], [0], [1], [0, 0, 1, 1], [], []>} : vector<1x8xf32>, vector<8x32xf32>, vector<1x32xf32> -> vector<1x32xf32>
    %21 = tpu.concatenate %3, %20 in 1 : vector<1x32xf32>, vector<1x32xf32> -> vector<1x64xf32>
    %c0_15 = arith.constant 0 : index
    %c0_16 = arith.constant 0 : index
    %22 = vector.load %arg5[%c0_15, %c0_16] : memref<64x64xf32, #tpu.memory_space<vmem>>, vector<64x64xf32>
    %cst_17 = arith.constant dense<0.000000e+00> : vector<1x64xf32>
    %23 = tpu.matmul %21, %22, %cst_17 {dimension_numbers = #tpu.dot_dimension_numbers<[1], [0], [0], [1], [0, 0, 1, 1], [], []>} : vector<1x64xf32>, vector<64x64xf32>, vector<1x64xf32> -> vector<1x64xf32>
    %c0_18 = arith.constant 0 : index
    %c0_19 = arith.constant 0 : index
    %24 = vector.load %arg6[%c0_18, %c0_19] : memref<1x64xf32, #tpu.memory_space<vmem>>, vector<1x64xf32>
    %25 = arith.addf %23, %24 : vector<1x64xf32>
    %26 = vector.extract_strided_slice %25 {offsets = [0, 0], sizes = [1, 32], strides = [1, 1]} : vector<1x64xf32> to vector<1x32xf32>
    %27 = vector.shape_cast %26 : vector<1x32xf32> to vector<1x32x1xf32>
    %28 = vector.extract_strided_slice %25 {offsets = [0, 32], sizes = [1, 32], strides = [1, 1]} : vector<1x64xf32> to vector<1x32xf32>
    %29 = vector.shape_cast %28 : vector<1x32xf32> to vector<1x32x1xf32>
    %30 = vector.broadcast %27 : vector<1x32x1xf32> to vector<1x32x256xf32>
    %31 = arith.mulf %30, %0 : vector<1x32x256xf32>
    %32 = vector.broadcast %29 : vector<1x32x1xf32> to vector<1x32x256xf32>
    %33 = arith.addf %31, %32 : vector<1x32x256xf32>
    %c0_20 = arith.constant 0 : index
    %c0_21 = arith.constant 0 : index
    %c0_22 = arith.constant 0 : index
    %34 = vector.load %arg7[%c0_20, %c0_21, %c0_22] : memref<1x32x256xf32, #tpu.memory_space<vmem>>, vector<1x32x256xf32>
    tpu.vector_store %arg7[%c0_20, %c0_21, %c0_22], %33 {strides = array<i32>} : memref<1x32x256xf32, #tpu.memory_space<vmem>>, vector<1x32x256xf32>,
    return
  }
  func.func @transform_0(%arg0: i32) -> (i32, i32, i32) {
    %c0_i32 = arith.constant 0 : i32
    %c0_i32_0 = arith.constant 0 : i32
    %c0_i32_1 = arith.constant 0 : i32
    return %arg0, %c0_i32, %c0_i32_0 : i32, i32, i32
  }
  func.func @transform_1(%arg0: i32) -> (i32, i32) {
    %c0_i32 = arith.constant 0 : i32
    %c0_i32_0 = arith.constant 0 : i32
    %c0_i32_1 = arith.constant 0 : i32
    return %c0_i32, %c0_i32_0 : i32, i32
  }
  func.func @transform_2(%arg0: i32) -> (i32, i32) {
    %c0_i32 = arith.constant 0 : i32
    %c0_i32_0 = arith.constant 0 : i32
    %c0_i32_1 = arith.constant 0 : i32
    return %c0_i32, %c0_i32_0 : i32, i32
  }
  func.func @transform_3(%arg0: i32) -> (i32, i32) {
    %c0_i32 = arith.constant 0 : i32
    %c0_i32_0 = arith.constant 0 : i32
    %c0_i32_1 = arith.constant 0 : i32
    return %c0_i32, %c0_i32_0 : i32, i32
  }
  func.func @transform_4(%arg0: i32) -> (i32, i32) {
    %c0_i32 = arith.constant 0 : i32
    %c0_i32_0 = arith.constant 0 : i32
    %c0_i32_1 = arith.constant 0 : i32
    return %c0_i32, %c0_i32_0 : i32, i32
  }
  func.func @transform_5(%arg0: i32) -> (i32, i32) {
    %c0_i32 = arith.constant 0 : i32
    %c0_i32_0 = arith.constant 0 : i32
    %c0_i32_1 = arith.constant 0 : i32
    return %c0_i32, %c0_i32_0 : i32, i32
  }
  func.func @transform_6(%arg0: i32) -> (i32, i32, i32) {
    %c0_i32 = arith.constant 0 : i32
    %c0_i32_0 = arith.constant 0 : i32
    %c0_i32_1 = arith.constant 0 : i32
    return %arg0, %c0_i32, %c0_i32_0 : i32, i32, i32
  }
}

</mosaic_0001>

<llo_original>
// kernel: tpu_custom_call.1
$region0: #{tpu_custom_call.1}
  #allocation0 [shape = 'u32[]', space=smem, size = 0x4, offset = 0x4, fixed_abs, tag = 'smem constant byte address 0x4 - core index']
  #allocation1 [shape = 'u32[144,128]{1,0:T(1,128)}', space=vmem, size = 0x12000, scoped, tag = 'internal scratch']
  %s0 = inlined_call_operand.hbm [shape: f32[2,32,256], index: 0, kind: input, shape index: {}]
  %s1 = inlined_call_operand.hbm [shape: f32[8,32], index: 1, kind: input, shape index: {}]
  %s2 = inlined_call_operand.hbm [shape: f32[8,32], index: 2, kind: input, shape index: {}]
  %s3 = inlined_call_operand.hbm [shape: f32[32,32], index: 3, kind: input, shape index: {}]
  %s4 = inlined_call_operand.hbm [shape: f32[64,64], index: 4, kind: input, shape index: {}]
  %s5 = inlined_call_operand.vmem [shape: f32[1,64], index: 5, kind: input, shape index: {}]
  %s6 = inlined_call_operand.hbm [shape: f32[2,32,256], index: 6, kind: output, shape index: {}]
  %s7 = sld [smem:[#allocation0]]
  $region77: #{tpu_custom_call.1} parent=0
    _
  %s9 = ssub.s32 1, %s7
  %s10 = scalar_select 0, %s9, %s7
  $region1: #{tpu_custom_call.1} parent=0
    #allocation2 [shape = 'u8[65536]{0}', space=vmem, size = 0x10000, scoped, tag = 'input window, operand 0']
    #allocation3 [shape = 's32[2]{0}', space=sflag, size = 0x8, scoped, tag = 'scoped memory for tpu_custom_call.1']
    #allocation4 [shape = 's32[2]{0}', space=sflag, size = 0x8, scoped, tag = 'scoped memory for tpu_custom_call.1']
    #allocation5 [shape = 'u8[4096]{0}', space=vmem, size = 0x1000, scoped, tag = 'input window, operand 1, single buffered']
    #allocation6 [shape = 's32[1]{0}', space=sflag, size = 0x4, scoped, tag = 'scoped memory for tpu_custom_call.1']
    #allocation7 [shape = 'u8[4096]{0}', space=vmem, size = 0x1000, scoped, tag = 'input window, operand 2, single buffered']
    #allocation8 [shape = 'u8[16384]{0}', space=vmem, size = 0x4000, scoped, tag = 'input window, operand 3, single buffered']
    #allocation9 [shape = 's32[1]{0}', space=sflag, size = 0x4, scoped, tag = 'scoped memory for tpu_custom_call.1']
    #allocation10 [shape = 'u8[32768]{0}', space=vmem, size = 0x8000, scoped, tag = 'input window, operand 4, single buffered']
    #allocation11 [shape = 'u8[65536]{0}', space=vmem, size = 0x10000, scoped, tag = 'output window, operand 0']
    %11 = vsyncpa [#allocation3], 0
    %s12 = scalar_lea.sflag [#allocation3], 1
    %13 = vsyncpa %s12, 0
    %14 = vsyncpa [#allocation6], 0
    %15 = vsyncpa [#allocation9], 0
    %16 = vsyncpa [#allocation4], 0
    %s17 = scalar_lea.sflag [#allocation4], 1
    %18 = vsyncpa %s17, 0
    loop: start=0, step=1, limit=4
    $region2: #{tpu_custom_call.1} parent=1 // loop_pre_header
      _
    $region3: #{tpu_custom_call.1} parent=1 // loop_header
      %s20 = sphi 0, %s24
      %p21 = scmp.ge.s32.totalorder %s20, 4
      %s30 = sphi 0, %s32
      %s33 = sphi 0, %s30
      %s34 = sphi 0, %s33
      %s50 = sphi 0, %s34
      %s54 = sphi 0, %s54
      %s56 = sphi 0, %s54
      %s57 = sphi 0, %s56
      %s71 = sphi 0, %s57
      %s75 = sphi 0, %s75
      %s77 = sphi 0, %s75
      %s78 = sphi 0, %s77
      %s92 = sphi 0, %s78
      %s96 = sphi 0, %s96
      %s98 = sphi 0, %s96
      %s99 = sphi 0, %s98
      %s113 = sphi 0, %s99
      %s117 = sphi 0, %s117
      %s119 = sphi 0, %s117
      %s120 = sphi 0, %s119
      %s134 = sphi 0, %s120
      %s138 = sphi 0, %s138
      %s140 = sphi 0, %s138
      %s141 = sphi 0, %s140
      %s155 = sphi 0, %s141
      %s161 = sphi 0, %s163
      %s164 = sphi 0, %s161
      %s165 = sphi 0, %s164
      %s181 = sphi 0, %s165
    $region4: #{tpu_custom_call.1} parent=1 // loop_header_branch
      %23 = sbr.rel (%p21) target = $region8
    $region5: #{tpu_custom_call.1} parent=1 // loop_body
      %s25 = ssub.s32 %s20, 1
      %s26 = ssub.s32 %s20, 2
      %s27 = sadd.s32 %s20, 1
      %s28 = ssub.s32 %s20, %s27
      %p29 = scmp.eq.s32.totalorder %s28, 0
      %s31 = sadd.s32 %s30, 1
      %s32 = scalar_select %p29, %s30, %s31
      %p35 = pneg %p29
      %p36 = scmp.eq.s32.totalorder %s20, 1
      %p37 = por %p35, %p36
      %p38 = scmp.ne.s32.totalorder %s30, %s33
      %p39 = scmp.eq.s32.totalorder %s20, 0
      %p40 = por %p38, %p39
      %p41 = scmp.ne.s32.totalorder %s30, %s33
      %p42 = scmp.eq.s32.totalorder %s25, 1
      %p43 = por %p41, %p42
      %p44 = scmp.ne.s32.totalorder %s33, %s34
      %p45 = scmp.eq.s32.totalorder %s25, 0
      %p46 = por %p44, %p45
      %p47 = scmp.ne.s32.totalorder %s33, %s34
      %p48 = scmp.eq.s32.totalorder %s26, 1
      %p49 = por %p47, %p48
      %p51 = scmp.ne.s32.totalorder %s34, %s50
      %p52 = scmp.eq.s32.totalorder %s26, 0
      %p53 = por %p51, %p52
      %s55 = sadd.s32 %s54, 1
      %p58 = scmp.eq.s32.totalorder %s20, 1
      %p59 = scmp.ne.s32.totalorder %s54, %s56
      %p60 = scmp.eq.s32.totalorder %s20, 0
      %p61 = por %p59, %p60
      %p62 = scmp.ne.s32.totalorder %s54, %s56
      %p63 = scmp.eq.s32.totalorder %s25, 1
      %p64 = por %p62, %p63
      %p65 = scmp.ne.s32.totalorder %s56, %s57
      %p66 = scmp.eq.s32.totalorder %s25, 0
      %p67 = por %p65, %p66
      %p68 = scmp.ne.s32.totalorder %s56, %s57
      %p69 = scmp.eq.s32.totalorder %s26, 1
      %p70 = por %p68, %p69
      %p72 = scmp.ne.s32.totalorder %s57, %s71
      %p73 = scmp.eq.s32.totalorder %s26, 0
      %p74 = por %p72, %p73
      %s76 = sadd.s32 %s75, 1
      %p79 = scmp.eq.s32.totalorder %s20, 1
      %p80 = scmp.ne.s32.totalorder %s75, %s77
      %p81 = scmp.eq.s32.totalorder %s20, 0
      %p82 = por %p80, %p81
      %p83 = scmp.ne.s32.totalorder %s75, %s77
      %p84 = scmp.eq.s32.totalorder %s25, 1
      %p85 = por %p83, %p84
      %p86 = scmp.ne.s32.totalorder %s77, %s78
      %p87 = scmp.eq.s32.totalorder %s25, 0
      %p88 = por %p86, %p87
      %p89 = scmp.ne.s32.totalorder %s77, %s78
      %p90 = scmp.eq.s32.totalorder %s26, 1
      %p91 = por %p89, %p90
      %p93 = scmp.ne.s32.totalorder %s78, %s92
      %p94 = scmp.eq.s32.totalorder %s26, 0
      %p95 = por %p93, %p94
      %s97 = sadd.s32 %s96, 1
      %p100 = scmp.eq.s32.totalorder %s20, 1
      %p101 = scmp.ne.s32.totalorder %s96, %s98
      %p102 = scmp.eq.s32.totalorder %s20, 0
      %p103 = por %p101, %p102
      %p104 = scmp.ne.s32.totalorder %s96, %s98
      %p105 = scmp.eq.s32.totalorder %s25, 1
      %p106 = por %p104, %p105
      %p107 = scmp.ne.s32.totalorder %s98, %s99
      %p108 = scmp.eq.s32.totalorder %s25, 0
      %p109 = por %p107, %p108
      %p110 = scmp.ne.s32.totalorder %s98, %s99
      %p111 = scmp.eq.s32.totalorder %s26, 1
      %p112 = por %p110, %p111
      %p114 = scmp.ne.s32.totalorder %s99, %s113
      %p115 = scmp.eq.s32.totalorder %s26, 0
      %p116 = por %p114, %p115
      %s118 = sadd.s32 %s117, 1
      %p121 = scmp.eq.s32.totalorder %s20, 1
      %p122 = scmp.ne.s32.totalorder %s117, %s119
      %p123 = scmp.eq.s32.totalorder %s20, 0
      %p124 = por %p122, %p123
      %p125 = scmp.ne.s32.totalorder %s117, %s119
      %p126 = scmp.eq.s32.totalorder %s25, 1
      %p127 = por %p125, %p126
      %p128 = scmp.ne.s32.totalorder %s119, %s120
      %p129 = scmp.eq.s32.totalorder %s25, 0
      %p130 = por %p128, %p129
      %p131 = scmp.ne.s32.totalorder %s119, %s120
      %p132 = scmp.eq.s32.totalorder %s26, 1
      %p133 = por %p131, %p132
      %p135 = scmp.ne.s32.totalorder %s120, %s134
      %p136 = scmp.eq.s32.totalorder %s26, 0
      %p137 = por %p135, %p136
      %s139 = sadd.s32 %s138, 1
      %p142 = scmp.eq.s32.totalorder %s20, 1
      %p143 = scmp.ne.s32.totalorder %s138, %s140
      %p144 = scmp.eq.s32.totalorder %s20, 0
      %p145 = por %p143, %p144
      %p146 = scmp.ne.s32.totalorder %s138, %s140
      %p147 = scmp.eq.s32.totalorder %s25, 1
      %p148 = por %p146, %p147
      %p149 = scmp.ne.s32.totalorder %s140, %s141
      %p150 = scmp.eq.s32.totalorder %s25, 0
      %p151 = por %p149, %p150
      %p152 = scmp.ne.s32.totalorder %s140, %s141
      %p153 = scmp.eq.s32.totalorder %s26, 1
      %p154 = por %p152, %p153
      %p156 = scmp.ne.s32.totalorder %s141, %s155
      %p157 = scmp.eq.s32.totalorder %s26, 0
      %p158 = por %p156, %p157
      %s159 = ssub.s32 %s20, %s27
      %p160 = scmp.eq.s32.totalorder %s159, 0
      %s162 = sadd.s32 %s161, 1
      %s163 = scalar_select %p160, %s161, %s162
      %p166 = pneg %p160
      %p167 = scmp.eq.s32.totalorder %s20, 1
      %p168 = por %p166, %p167
      %p169 = scmp.ne.s32.totalorder %s161, %s164
      %p170 = scmp.eq.s32.totalorder %s20, 0
      %p171 = por %p169, %p170
      %p172 = scmp.ne.s32.totalorder %s161, %s164
      %p173 = scmp.eq.s32.totalorder %s25, 1
      %p174 = por %p172, %p173
      %p175 = scmp.ne.s32.totalorder %s164, %s165
      %p176 = scmp.eq.s32.totalorder %s25, 0
      %p177 = por %p175, %p176
      %p178 = scmp.ne.s32.totalorder %s164, %s165
      %p179 = scmp.eq.s32.totalorder %s26, 1
      %p180 = por %p178, %p179
      %p182 = scmp.ne.s32.totalorder %s165, %s181
      %p183 = scmp.eq.s32.totalorder %s26, 0
      %p184 = por %p182, %p183
      %p185 = scmp.le.s32.totalorder 1, %s20
      %p186 = scmp.lt.s32.totalorder %s20, 3
      %p187 = pnand %p185, %p186
      %p188 = pneg %p187
      // Predicated region
      $region9: #{tpu_custom_call.1} parent=5 // pred_check
        _
      $region10: #{tpu_custom_call.1} parent=5 // pred_check_branch
        %190 = sbr.rel (%p187) target = $region12
      $region11: #{tpu_custom_call.1} parent=5 // pred_region
        %s191 = ssub.s32 %s20, 1
        // Predicated region
        $region13: #{tpu_custom_call.1} parent=11 // pred_check
          %p192 = pneg %p67
        $region14: #{tpu_custom_call.1} parent=11 // pred_check_branch
          %194 = sbr.rel (%p192) target = $region16
        $region15: #{tpu_custom_call.1} parent=11 // pred_region
          %s196 = ssub.s32 128, 128
          %197 = vsyncadd [#allocation6], %s196
          %s199 = sshll.u32 [#allocation5], 4
          %s200 = int_to_ptr.vmem [resolvable:$true] %s199
          %202 = dma.hbm_to_vmem [thread:$0]  %s1, 128, %s200, [#allocation6]
        $region16: #{tpu_custom_call.1} parent=11 // pred_fallthru
          _
        // Predicated region
        $region17: #{tpu_custom_call.1} parent=11 // pred_check
          %p203 = pneg %p88
        $region18: #{tpu_custom_call.1} parent=11 // pred_check_branch
          %205 = sbr.rel (%p203) target = $region20
        $region19: #{tpu_custom_call.1} parent=11 // pred_region
          %s207 = ssub.s32 128, 128
          %208 = vsyncadd [#allocation6], %s207
          %s210 = sshll.u32 [#allocation7], 4
          %s211 = int_to_ptr.vmem [resolvable:$true] %s210
          %213 = dma.hbm_to_vmem [thread:$0]  %s2, 128, %s211, [#allocation6]
        $region20: #{tpu_custom_call.1} parent=11 // pred_fallthru
          _
        // Predicated region
        $region21: #{tpu_custom_call.1} parent=11 // pred_check
          %p214 = pneg %p109
        $region22: #{tpu_custom_call.1} parent=11 // pred_check_branch
          %216 = sbr.rel (%p214) target = $region24
        $region23: #{tpu_custom_call.1} parent=11 // pred_region
          %s218 = ssub.s32 512, 512
          %219 = vsyncadd [#allocation9], %s218
          %s220 = sshll.u32 [#allocation8], 4
          %s221 = int_to_ptr.vmem [resolvable:$true] %s220
          %226 = dma.hbm_to_vmem [thread:$0]  %s3, 512, %s221, [#allocation9], 128, 128, 8
        $region24: #{tpu_custom_call.1} parent=11 // pred_fallthru
          _
        // Predicated region
        $region25: #{tpu_custom_call.1} parent=11 // pred_check
          %p227 = pneg %p130
        $region26: #{tpu_custom_call.1} parent=11 // pred_check_branch
          %229 = sbr.rel (%p227) target = $region28
        $region27: #{tpu_custom_call.1} parent=11 // pred_region
          %s231 = ssub.s32 1024, 1024
          %232 = vsyncadd [#allocation9], %s231
          %s233 = sshll.u32 [#allocation10], 4
          %s234 = int_to_ptr.vmem [resolvable:$true] %s233
          %239 = dma.hbm_to_vmem [thread:$0]  %s4, 1024, %s234, [#allocation9], 128, 128, 8
        $region28: #{tpu_custom_call.1} parent=11 // pred_fallthru
          _
        // Predicated region
        $region29: #{tpu_custom_call.1} parent=11 // pred_check
          %p240 = pneg %p151
        $region30: #{tpu_custom_call.1} parent=11 // pred_check_branch
          %242 = sbr.rel (%p240) target = $region32
        $region31: #{tpu_custom_call.1} parent=11 // pred_region
          _
        $region32: #{tpu_custom_call.1} parent=11 // pred_fallthru
          _
      $region12: #{tpu_custom_call.1} parent=5 // pred_fallthru
        _
      %p243 = scmp.lt.s32.totalorder %s20, 2
      // Predicated region
      $region33: #{tpu_custom_call.1} parent=5 // pred_check
        %p244 = pneg %p243
      $region34: #{tpu_custom_call.1} parent=5 // pred_check_branch
        %246 = sbr.rel (%p244) target = $region36
      $region35: #{tpu_custom_call.1} parent=5 // pred_region
        // Predicated region
        $region37: #{tpu_custom_call.1} parent=35 // pred_check
          %p247 = pneg %p40
        $region38: #{tpu_custom_call.1} parent=35 // pred_check_branch
          %249 = sbr.rel (%p247) target = $region40
        $region39: #{tpu_custom_call.1} parent=35 // pred_region
          %s250 = sand.u32 %s30, 1
          %s251 = scalar_lea.sflag [#allocation3], %s250
          %s252 = sand.u32 %s30, 1
          %s253 = smul.addr %s252, 64
          %s254 = scalar_lea.vmem [#allocation2], %s253
          %s256 = ssub.s32 1024, 1024
          %257 = vsyncadd %s251, %s256
          %s258 = smul.addr %s20, 8
          %s259 = smul.addr %s258, 128
          %s260 = scalar_lea.hbm %s0, %s259
          %s261 = sshll.u32 %s254, 4
          %s262 = int_to_ptr.vmem [resolvable:$true] %s261
          %267 = dma.hbm_to_vmem [thread:$0]  %s260, 1024, %s262, %s251, 256, 256, 16
        $region40: #{tpu_custom_call.1} parent=35 // pred_fallthru
          _
      $region36: #{tpu_custom_call.1} parent=5 // pred_fallthru
        _
      %p268 = scmp.le.s32.totalorder 1, %s20
      %p269 = scmp.lt.s32.totalorder %s20, 3
      %p270 = pnand %p268, %p269
      %p271 = pneg %p270
      // Predicated region
      $region41: #{tpu_custom_call.1} parent=5 // pred_check
        _
      $region42: #{tpu_custom_call.1} parent=5 // pred_check_branch
        %273 = sbr.rel (%p270) target = $region44
      $region43: #{tpu_custom_call.1} parent=5 // pred_region
        %s274 = ssub.s32 %s20, 1
        %s275 = sand.u32 %s33, 1
        %s276 = scalar_lea.sflag [#allocation3], %s275
        %s277 = sand.u32 %s33, 1
        %s278 = smul.addr %s277, 64
        %s279 = scalar_lea.vmem [#allocation2], %s278
        // Predicated region
        $region45: #{tpu_custom_call.1} parent=43 // pred_check
          %p280 = pneg %p46
        $region46: #{tpu_custom_call.1} parent=43 // pred_check_branch
          %282 = sbr.rel (%p280) target = $region48
        $region47: #{tpu_custom_call.1} parent=43 // pred_region
          %283 = dma.done %s276, 1024
        $region48: #{tpu_custom_call.1} parent=43 // pred_fallthru
          _
        // Predicated region
        $region49: #{tpu_custom_call.1} parent=43 // pred_check
          %p284 = pneg %p67
        $region50: #{tpu_custom_call.1} parent=43 // pred_check_branch
          %286 = sbr.rel (%p284) target = $region52
        $region51: #{tpu_custom_call.1} parent=43 // pred_region
          %287 = dma.done [#allocation6], 128
        $region52: #{tpu_custom_call.1} parent=43 // pred_fallthru
          _
        // Predicated region
        $region53: #{tpu_custom_call.1} parent=43 // pred_check
          %p288 = pneg %p88
        $region54: #{tpu_custom_call.1} parent=43 // pred_check_branch
          %290 = sbr.rel (%p288) target = $region56
        $region55: #{tpu_custom_call.1} parent=43 // pred_region
          %291 = dma.done [#allocation6], 128
        $region56: #{tpu_custom_call.1} parent=43 // pred_fallthru
          _
        // Predicated region
        $region57: #{tpu_custom_call.1} parent=43 // pred_check
          %p292 = pneg %p109
        $region58: #{tpu_custom_call.1} parent=43 // pred_check_branch
          %294 = sbr.rel (%p292) target = $region60
        $region59: #{tpu_custom_call.1} parent=43 // pred_region
          %295 = dma.done [#allocation9], 512
        $region60: #{tpu_custom_call.1} parent=43 // pred_fallthru
          _
        // Predicated region
        $region61: #{tpu_custom_call.1} parent=43 // pred_check
          %p296 = pneg %p130
        $region62: #{tpu_custom_call.1} parent=43 // pred_check_branch
          %298 = sbr.rel (%p296) target = $region64
        $region63: #{tpu_custom_call.1} parent=43 // pred_region
          %299 = dma.done [#allocation9], 1024
        $region64: #{tpu_custom_call.1} parent=43 // pred_fallthru
          _
        %s300 = sand.u32 %s33, 1
        %s301 = scalar_lea.sflag [#allocation3], %s300
        %s302 = sand.u32 %s33, 1
        %s303 = smul.addr %s302, 64
        %s304 = scalar_lea.vmem [#allocation2], %s303
        %p305 = pneg %p46
        %p306 = pneg %p43
        %p307 = pneg %p67
        %p308 = pneg %p64
        %p309 = pneg %p88
        %p310 = pneg %p85
        %p311 = pneg %p109
        %p312 = pneg %p106
        %p313 = pneg %p130
        %p314 = pneg %p127
        %p315 = pneg %p151
        %p316 = pneg %p148
        %p317 = pneg %p177
        %p318 = pneg %p174
        %s319 = sand.u32 %s164, 1
        %s320 = scalar_lea.sflag [#allocation4], %s319
        %s321 = sand.u32 %s164, 1
        %s322 = smul.addr %s321, 64
        %s323 = scalar_lea.vmem [#allocation11], %s322
        %v324 = vld [vmem:[%s279] sm:$0xff]
        %v325 = vld [vmem:[%s279 + $0x8] sm:$0xff]
        %v326 = vld [vmem:[%s279 + $0x10] sm:$0xff]
        %v327 = vld [vmem:[%s279 + $0x18] sm:$0xff]
        %v328 = vld [vmem:[%s279 + $0x20] sm:$0xff]
        %v329 = vld [vmem:[%s279 + $0x28] sm:$0xff]
        %v330 = vld [vmem:[%s279 + $0x30] sm:$0xff]
        %v331 = vld [vmem:[%s279 + $0x38] sm:$0xff]
        %v332 = vadd.f32 %v324, %v325
        %333 = vadd.xlane.f32.xlu0 %v332
        %v334 = vpop.xlane.xlu0 %333
        %v335 = vadd.f32 %v326, %v327
        %336 = vadd.xlane.f32.xlu0 %v335
        %v337 = vpop.xlane.xlu0 %336
        %v338 = vadd.f32 %v328, %v329
        %339 = vadd.xlane.f32.xlu0 %v338
        %v340 = vpop.xlane.xlu0 %339
        %v341 = vadd.f32 %v330, %v331
        %342 = vadd.xlane.f32.xlu0 %v341
        %v343 = vpop.xlane.xlu0 %342
        %v344 = vmul.f32 %v334, 0.00390625
        %v345 = vmul.f32 %v337, 0.00390625
        %v346 = vmul.f32 %v340, 0.00390625
        %v347 = vmul.f32 %v343, 0.00390625
        %v348 = vld [vmem:[#allocation8] sm:$0xff]
        %v349 = vld [vmem:[#allocation8 + $0x8] sm:$0xff]
        %v350 = vld [vmem:[#allocation8 + $0x10] sm:$0xff]
        %v351 = vld [vmem:[#allocation8 + $0x18] sm:$0xff]
        %v356 = vlaneseq
        %v357 = vand.u32 %v356, 127
        %v358 = vlaneseq
        %v359 = vshrl.u32 %v358, 7
        %v360 = vsub.s32 %v357, %v359
        %v361 = vrot.slane %v344, %v360
        %v362 = vadd.s32 %v357, 4294967288
        %v363 = vlaneseq
        %v364 = vshrl.u32 %v363, 7
        %v365 = vsub.s32 %v362, %v364
        %v366 = vrot.slane %v345, %v365
        %vm367 = vcmask 130112
        %v368 = vsel %vm367, %v366, %v361
        %v369 = vadd.s32 %v357, 4294967280
        %v370 = vlaneseq
        %v371 = vshrl.u32 %v370, 7
        %v372 = vsub.s32 %v369, %v371
        %v373 = vrot.slane %v346, %v372
        %vm374 = vcmask 195712
        %v375 = vsel %vm374, %v373, %v368
        %v376 = vadd.s32 %v357, 4294967272
        %v377 = vlaneseq
        %v378 = vshrl.u32 %v377, 7
        %v379 = vsub.s32 %v376, %v378
        %v380 = vrot.slane %v347, %v379
        %vm381 = vcmask 261312
        %v382 = vsel %vm381, %v380, %v375
        %vm383 = vcmask 261120
        %v384 = vsel %vm383, %v382, 0
        %386 = vmatprep.subr.mxu0 0.0
        %387 = vmatpush1.msra.mxu0 %v348
        %388 = vmatprep.subr.mxu0 0.0
        %389 = vmatpush1.msra.mxu0 %v349
        %390 = vmatprep.subr.mxu0 0.0
        %391 = vmatpush1.msra.mxu0 %v350
        %392 = vmatprep.subr.mxu0 0.0
        %393 = vmatpush1.msra.mxu0 %v351
        %394 = vmatprep.subr.mxu0 0.0
        %395 = vmatpush1.msra.mxu0 0.0
        %396 = vmatprep.subr.mxu0 0.0
        %397 = vmatpush1.msra.mxu0 0.0
        %398 = vmatprep.subr.mxu0 0.0
        %399 = vmatpush1.msra.mxu0 0.0
        %400 = vmatprep.subr.mxu0 0.0
        %401 = vmatpush1.msra.mxu0 0.0
        %402 = vmatprep.subr.mxu0 0.0
        %403 = vmatpush1.msra.mxu0 0.0
        %404 = vmatprep.subr.mxu0 0.0
        %405 = vmatpush1.msra.mxu0 0.0
        %406 = vmatprep.subr.mxu0 0.0
        %407 = vmatpush1.msra.mxu0 0.0
        %408 = vmatprep.subr.mxu0 0.0
        %409 = vmatpush1.msra.mxu0 0.0
        %410 = vmatprep.subr.mxu0 0.0
        %411 = vmatpush1.msra.mxu0 0.0
        %412 = vmatprep.subr.mxu0 0.0
        %413 = vmatpush1.msra.mxu0 0.0
        %414 = vmatprep.subr.mxu0 0.0
        %415 = vmatpush1.msra.mxu0 0.0
        %416 = vmatprep.subr.mxu0 0.0
        %417 = vmatpush1.msra.mxu0 0.0
        %418 = vmatprep.subr.mxu0 0.0
        %419 = vmatpush1.msra.mxu0 0.0
        %420 = vmatprep.subr.mxu0 0.0
        %421 = vmatpush1.msra.mxu0 0.0
        %422 = vmatprep.subr.mxu0 0.0
        %423 = vmatpush1.msra.mxu0 0.0
        %424 = vmatprep.subr.mxu0 0.0
        %425 = vmatpush1.msra.mxu0 0.0
        %426 = vmatprep.subr.mxu0 0.0
        %427 = vmatpush1.msra.mxu0 0.0
        %428 = vmatprep.subr.mxu0 0.0
        %429 = vmatpush1.msra.mxu0 0.0
        %430 = vmatprep.subr.mxu0 0.0
        %431 = vmatpush1.msra.mxu0 0.0
        %432 = vmatprep.subr.mxu0 0.0
        %433 = vmatpush1.msra.mxu0 0.0
        %434 = vmatprep.subr.mxu0 0.0
        %435 = vmatpush1.msra.mxu0 0.0
        %436 = vmatprep.subr.mxu0 0.0
        %437 = vmatpush1.msra.mxu0 0.0
        %438 = vmatprep.subr.mxu0 0.0
        %439 = vmatpush1.msra.mxu0 0.0
        %440 = vmatprep.subr.mxu0 0.0
        %441 = vmatpush1.msra.mxu0 0.0
        %442 = vmatprep.subr.mxu0 0.0
        %443 = vmatpush1.msra.mxu0 0.0
        %444 = vmatprep.subr.mxu0 0.0
        %445 = vmatpush1.msra.mxu0 0.0
        %446 = vmatprep.subr.mxu0 0.0
        %447 = vmatpush1.msra.mxu0 0.0
        %448 = vmatprep.subr.mxu0 0.0
        %449 = vmatpush1.msra.mxu0 0.0
        %450 = vmatprep.mubr.f32.mxu0 0.0
        %451 = vmatmul.mubr.f32.gmra.mrb[0].mxu0 %v384
        %v452 = vpop.f32.mrb[0].mxu0
        %v453 = vadd.f32 0.0, %v452
        %v454 = vpop.f32.mrb[0].mxu0
        %455 = vdwg.mxu0
        %v456 = vld [vmem:[#allocation5] sm:$0xff]
        %v458 = vsel %vm383, %v453, 0
        %v461 = vsel %vm383, %v456, 0
        %463 = vmatprep.subr.mxu0 0.0
        %464 = vmatpush1.xpose.msra.mxu0 %v461
        %465 = vmatprep.subr.mxu0 0.0
        %466 = vmatpush1.xpose.msra.mxu0 0.0
        %467 = vmatprep.subr.mxu0 0.0
        %468 = vmatpush1.xpose.msra.mxu0 0.0
        %469 = vmatprep.subr.mxu0 0.0
        %470 = vmatpush1.xpose.msra.mxu0 0.0
        %471 = vmatprep.subr.mxu0 0.0
        %472 = vmatpush1.xpose.msra.mxu0 0.0
        %473 = vmatprep.subr.mxu0 0.0
        %474 = vmatpush1.xpose.msra.mxu0 0.0
        %475 = vmatprep.subr.mxu0 0.0
        %476 = vmatpush1.xpose.msra.mxu0 0.0
        %477 = vmatprep.subr.mxu0 0.0
        %478 = vmatpush1.xpose.msra.mxu0 0.0
        %479 = vmatprep.subr.mxu0 0.0
        %480 = vmatpush1.xpose.msra.mxu0 0.0
        %481 = vmatprep.subr.mxu0 0.0
        %482 = vmatpush1.xpose.msra.mxu0 0.0
        %483 = vmatprep.subr.mxu0 0.0
        %484 = vmatpush1.xpose.msra.mxu0 0.0
        %485 = vmatprep.subr.mxu0 0.0
        %486 = vmatpush1.xpose.msra.mxu0 0.0
        %487 = vmatprep.subr.mxu0 0.0
        %488 = vmatpush1.xpose.msra.mxu0 0.0
        %489 = vmatprep.subr.mxu0 0.0
        %490 = vmatpush1.xpose.msra.mxu0 0.0
        %491 = vmatprep.subr.mxu0 0.0
        %492 = vmatpush1.xpose.msra.mxu0 0.0
        %493 = vmatprep.subr.mxu0 0.0
        %494 = vmatpush1.xpose.msra.mxu0 0.0
        %495 = vmatprep.subr.mxu0 0.0
        %496 = vmatpush1.xpose.msra.mxu0 0.0
        %497 = vmatprep.subr.mxu0 0.0
        %498 = vmatpush1.xpose.msra.mxu0 0.0
        %499 = vmatprep.subr.mxu0 0.0
        %500 = vmatpush1.xpose.msra.mxu0 0.0
        %501 = vmatprep.subr.mxu0 0.0
        %502 = vmatpush1.xpose.msra.mxu0 0.0
        %503 = vmatprep.subr.mxu0 0.0
        %504 = vmatpush1.xpose.msra.mxu0 0.0
        %505 = vmatprep.subr.mxu0 0.0
        %506 = vmatpush1.xpose.msra.mxu0 0.0
        %507 = vmatprep.subr.mxu0 0.0
        %508 = vmatpush1.xpose.msra.mxu0 0.0
        %509 = vmatprep.subr.mxu0 0.0
        %510 = vmatpush1.xpose.msra.mxu0 0.0
        %511 = vmatprep.subr.mxu0 0.0
        %512 = vmatpush1.xpose.msra.mxu0 0.0
        %513 = vmatprep.subr.mxu0 0.0
        %514 = vmatpush1.xpose.msra.mxu0 0.0
        %515 = vmatprep.subr.mxu0 0.0
        %516 = vmatpush1.xpose.msra.mxu0 0.0
        %517 = vmatprep.subr.mxu0 0.0
        %518 = vmatpush1.xpose.msra.mxu0 0.0
        %519 = vmatprep.subr.mxu0 0.0
        %520 = vmatpush1.xpose.msra.mxu0 0.0
        %521 = vmatprep.subr.mxu0 0.0
        %522 = vmatpush1.xpose.msra.mxu0 0.0
        %523 = vmatprep.subr.mxu0 0.0
        %524 = vmatpush1.xpose.msra.mxu0 0.0
        %525 = vmatprep.subr.mxu0 0.0
        %526 = vmatpush1.xpose.msra.mxu0 0.0
        %527 = vmatprep.mubr.f32.mxu0 0.0
        %528 = vmatmul.mubr.f32.gmra.mrb[0].mxu0 %v458
        %v529 = vpop.f32.mrb[0].mxu0
        %v530 = vadd.f32 0.0, %v529
        %v531 = vpop.f32.mrb[0].mxu0
        %532 = vdwg.mxu0
        %v533 = vmul.f32 %v530, 0.17677669
        %vm534 = vcmask 57344
        %v535 = vsel %vm534, %v533, -inf
        %536 = vmax.xlane.f32.xlu0 %v535
        %v537 = vpop.xlane.xlu0 %536
        %v538 = vsub.f32 %v533, %v537
        %v539 = vmul.f32 %v538, 1.442695
        %v540 = vpow.pop %v539
        %v541 = vsel %vm534, %v540, 0.0
        %542 = vadd.xlane.f32.xlu0 %v541
        %v543 = vpop.xlane.xlu0 %542
        %v544 = vrcp.pop %v543
        %v545 = vmul.f32 %v540, %v544
        %v546 = vld [vmem:[#allocation7] sm:$0xff]
        %vm547 = vcmask 64512
        %v549 = vsel %vm547, %v545, 0
        %551 = vmatprep.subr.mxu0 0.0
        %552 = vmatpush1.msra.mxu0 %v546
        %553 = vmatprep.subr.mxu0 0.0
        %554 = vmatpush1.msra.mxu0 0.0
        %555 = vmatprep.subr.mxu0 0.0
        %556 = vmatpush1.msra.mxu0 0.0
        %557 = vmatprep.subr.mxu0 0.0
        %558 = vmatpush1.msra.mxu0 0.0
        %559 = vmatprep.subr.mxu0 0.0
        %560 = vmatpush1.msra.mxu0 0.0
        %561 = vmatprep.subr.mxu0 0.0
        %562 = vmatpush1.msra.mxu0 0.0
        %563 = vmatprep.subr.mxu0 0.0
        %564 = vmatpush1.msra.mxu0 0.0
        %565 = vmatprep.subr.mxu0 0.0
        %566 = vmatpush1.msra.mxu0 0.0
        %567 = vmatprep.subr.mxu0 0.0
        %568 = vmatpush1.msra.mxu0 0.0
        %569 = vmatprep.subr.mxu0 0.0
        %570 = vmatpush1.msra.mxu0 0.0
        %571 = vmatprep.subr.mxu0 0.0
        %572 = vmatpush1.msra.mxu0 0.0
        %573 = vmatprep.subr.mxu0 0.0
        %574 = vmatpush1.msra.mxu0 0.0
        %575 = vmatprep.subr.mxu0 0.0
        %576 = vmatpush1.msra.mxu0 0.0
        %577 = vmatprep.subr.mxu0 0.0
        %578 = vmatpush1.msra.mxu0 0.0
        %579 = vmatprep.subr.mxu0 0.0
        %580 = vmatpush1.msra.mxu0 0.0
        %581 = vmatprep.subr.mxu0 0.0
        %582 = vmatpush1.msra.mxu0 0.0
        %583 = vmatprep.subr.mxu0 0.0
        %584 = vmatpush1.msra.mxu0 0.0
        %585 = vmatprep.subr.mxu0 0.0
        %586 = vmatpush1.msra.mxu0 0.0
        %587 = vmatprep.subr.mxu0 0.0
        %588 = vmatpush1.msra.mxu0 0.0
        %589 = vmatprep.subr.mxu0 0.0
        %590 = vmatpush1.msra.mxu0 0.0
        %591 = vmatprep.subr.mxu0 0.0
        %592 = vmatpush1.msra.mxu0 0.0
        %593 = vmatprep.subr.mxu0 0.0
        %594 = vmatpush1.msra.mxu0 0.0
        %595 = vmatprep.subr.mxu0 0.0
        %596 = vmatpush1.msra.mxu0 0.0
        %597 = vmatprep.subr.mxu0 0.0
        %598 = vmatpush1.msra.mxu0 0.0
        %599 = vmatprep.subr.mxu0 0.0
        %600 = vmatpush1.msra.mxu0 0.0
        %601 = vmatprep.subr.mxu0 0.0
        %602 = vmatpush1.msra.mxu0 0.0
        %603 = vmatprep.subr.mxu0 0.0
        %604 = vmatpush1.msra.mxu0 0.0
        %605 = vmatprep.subr.mxu0 0.0
        %606 = vmatpush1.msra.mxu0 0.0
        %607 = vmatprep.subr.mxu0 0.0
        %608 = vmatpush1.msra.mxu0 0.0
        %609 = vmatprep.subr.mxu0 0.0
        %610 = vmatpush1.msra.mxu0 0.0
        %611 = vmatprep.subr.mxu0 0.0
        %612 = vmatpush1.msra.mxu0 0.0
        %613 = vmatprep.subr.mxu0 0.0
        %614 = vmatpush1.msra.mxu0 0.0
        %615 = vmatprep.mubr.f32.mxu0 0.0
        %616 = vmatmul.mubr.f32.gmra.mrb[0].mxu0 %v549
        %v617 = vpop.f32.mrb[0].mxu0
        %v618 = vadd.f32 0.0, %v617
        %v619 = vpop.f32.mrb[0].mxu0
        %620 = vdwg.mxu0
        %623 = vrot.lane.b32.xlu0 %v618, 32
        %v624 = vpop.permute.xlu0 %623
        %v626 = vsel %vm383, %v382, %v624
        %v627 = vld [vmem:[#allocation10] sm:$0xff]
        %v628 = vld [vmem:[#allocation10 + $0x8] sm:$0xff]
        %v629 = vld [vmem:[#allocation10 + $0x10] sm:$0xff]
        %v630 = vld [vmem:[#allocation10 + $0x18] sm:$0xff]
        %v631 = vld [vmem:[#allocation10 + $0x20] sm:$0xff]
        %v632 = vld [vmem:[#allocation10 + $0x28] sm:$0xff]
        %v633 = vld [vmem:[#allocation10 + $0x30] sm:$0xff]
        %v634 = vld [vmem:[#allocation10 + $0x38] sm:$0xff]
        %v635 = vld [vmem:[%s5] sm:$0x1]
        %vm636 = vcmask 523264
        %v638 = vsel %vm636, %v626, 0
        %640 = vmatprep.subr.mxu0 0.0
        %641 = vmatpush1.msra.mxu0 %v627
        %642 = vmatprep.subr.mxu0 0.0
        %643 = vmatpush1.msra.mxu0 %v628
        %644 = vmatprep.subr.mxu0 0.0
        %645 = vmatpush1.msra.mxu0 %v629
        %646 = vmatprep.subr.mxu0 0.0
        %647 = vmatpush1.msra.mxu0 %v630
        %648 = vmatprep.subr.mxu0 0.0
        %649 = vmatpush1.msra.mxu0 %v631
        %650 = vmatprep.subr.mxu0 0.0
        %651 = vmatpush1.msra.mxu0 %v632
        %652 = vmatprep.subr.mxu0 0.0
        %653 = vmatpush1.msra.mxu0 %v633
        %654 = vmatprep.subr.mxu0 0.0
        %655 = vmatpush1.msra.mxu0 %v634
        %656 = vmatprep.subr.mxu0 0.0
        %657 = vmatpush1.msra.mxu0 0.0
        %658 = vmatprep.subr.mxu0 0.0
        %659 = vmatpush1.msra.mxu0 0.0
        %660 = vmatprep.subr.mxu0 0.0
        %661 = vmatpush1.msra.mxu0 0.0
        %662 = vmatprep.subr.mxu0 0.0
        %663 = vmatpush1.msra.mxu0 0.0
        %664 = vmatprep.subr.mxu0 0.0
        %665 = vmatpush1.msra.mxu0 0.0
        %666 = vmatprep.subr.mxu0 0.0
        %667 = vmatpush1.msra.mxu0 0.0
        %668 = vmatprep.subr.mxu0 0.0
        %669 = vmatpush1.msra.mxu0 0.0
        %670 = vmatprep.subr.mxu0 0.0
        %671 = vmatpush1.msra.mxu0 0.0
        %672 = vmatprep.subr.mxu0 0.0
        %673 = vmatpush1.msra.mxu0 0.0
        %674 = vmatprep.subr.mxu0 0.0
        %675 = vmatpush1.msra.mxu0 0.0
        %676 = vmatprep.subr.mxu0 0.0
        %677 = vmatpush1.msra.mxu0 0.0
        %678 = vmatprep.subr.mxu0 0.0
        %679 = vmatpush1.msra.mxu0 0.0
        %680 = vmatprep.subr.mxu0 0.0
        %681 = vmatpush1.msra.mxu0 0.0
        %682 = vmatprep.subr.mxu0 0.0
        %683 = vmatpush1.msra.mxu0 0.0
        %684 = vmatprep.subr.mxu0 0.0
        %685 = vmatpush1.msra.mxu0 0.0
        %686 = vmatprep.subr.mxu0 0.0
        %687 = vmatpush1.msra.mxu0 0.0
        %688 = vmatprep.subr.mxu0 0.0
        %689 = vmatpush1.msra.mxu0 0.0
        %690 = vmatprep.subr.mxu0 0.0
        %691 = vmatpush1.msra.mxu0 0.0
        %692 = vmatprep.subr.mxu0 0.0
        %693 = vmatpush1.msra.mxu0 0.0
        %694 = vmatprep.subr.mxu0 0.0
        %695 = vmatpush1.msra.mxu0 0.0
        %696 = vmatprep.subr.mxu0 0.0
        %697 = vmatpush1.msra.mxu0 0.0
        %698 = vmatprep.subr.mxu0 0.0
        %699 = vmatpush1.msra.mxu0 0.0
        %700 = vmatprep.subr.mxu0 0.0
        %701 = vmatpush1.msra.mxu0 0.0
        %702 = vmatprep.subr.mxu0 0.0
        %703 = vmatpush1.msra.mxu0 0.0
        %704 = vmatprep.mubr.f32.mxu0 0.0
        %705 = vmatmul.mubr.f32.gmra.mrb[0].mxu0 %v638
        %v706 = vpop.f32.mrb[0].mxu0
        %v707 = vadd.f32 %v635, %v706
        %v708 = vpop.f32.mrb[0].mxu0
        %709 = vdwg.mxu0
        %v710 = vlaneseq
        %v711 = vshrl.u32 %v710, 7
        %v712 = vsub.s32 0, %v711
        %v713 = vrot.slane %v707, %v712
        %715 = vbcast.lane.b32.xlu0 %v713, 256
        %v716 = vpop.permute.xlu0 %715
        %s718 = sor.u32 256, 8
        %719 = vbcast.lane.b32.xlu0 %v713, %s718
        %v720 = vpop.permute.xlu0 %719
        %s722 = sor.u32 256, 16
        %723 = vbcast.lane.b32.xlu0 %v713, %s722
        %v724 = vpop.permute.xlu0 %723
        %s726 = sor.u32 256, 24
        %727 = vbcast.lane.b32.xlu0 %v713, %s726
        %v728 = vpop.permute.xlu0 %727
        %s730 = sor.u32 256, 32
        %731 = vbcast.lane.b32.xlu0 %v713, %s730
        %v732 = vpop.permute.xlu0 %731
        %s734 = sor.u32 256, 40
        %735 = vbcast.lane.b32.xlu0 %v713, %s734
        %v736 = vpop.permute.xlu0 %735
        %s738 = sor.u32 256, 48
        %739 = vbcast.lane.b32.xlu0 %v713, %s738
        %v740 = vpop.permute.xlu0 %739
        %s742 = sor.u32 256, 56
        %743 = vbcast.lane.b32.xlu0 %v713, %s742
        %v744 = vpop.permute.xlu0 %743
        %v745 = vmul.f32 %v716, %v324
        %v746 = vmul.f32 %v716, %v325
        %v747 = vmul.f32 %v720, %v326
        %v748 = vmul.f32 %v720, %v327
        %v749 = vmul.f32 %v724, %v328
        %v750 = vmul.f32 %v724, %v329
        %v751 = vmul.f32 %v728, %v330
        %v752 = vmul.f32 %v728, %v331
        %v753 = vadd.f32 %v745, %v732
        %v754 = vadd.f32 %v746, %v732
        %v755 = vadd.f32 %v747, %v736
        %v756 = vadd.f32 %v748, %v736
        %v757 = vadd.f32 %v749, %v740
        %v758 = vadd.f32 %v750, %v740
        %v759 = vadd.f32 %v751, %v744
        %v760 = vadd.f32 %v752, %v744
        %761 = vst [vmem:[%s323] sm:$0xff] %v753
        %762 = vst [vmem:[%s323 + $0x8] sm:$0xff] %v754
        %763 = vst [vmem:[%s323 + $0x10] sm:$0xff] %v755
        %764 = vst [vmem:[%s323 + $0x18] sm:$0xff] %v756
        %765 = vst [vmem:[%s323 + $0x20] sm:$0xff] %v757
        %766 = vst [vmem:[%s323 + $0x28] sm:$0xff] %v758
        %767 = vst [vmem:[%s323 + $0x30] sm:$0xff] %v759
        %768 = vst [vmem:[%s323 + $0x38] sm:$0xff] %v760
        %s769 = sand.u32 %s164, 1
        %s770 = scalar_lea.sflag [#allocation4], %s769
        %s771 = sand.u32 %s164, 1
        %s772 = smul.addr %s771, 64
        %s773 = scalar_lea.vmem [#allocation11], %s772
        // Predicated region
        $region65: #{tpu_custom_call.1} parent=43 // pred_check
          %p774 = pneg %p174
        $region66: #{tpu_custom_call.1} parent=43 // pred_check_branch
          %776 = sbr.rel (%p774) target = $region68
        $region67: #{tpu_custom_call.1} parent=43 // pred_region
          %s778 = ssub.s32 1024, 1024
          %779 = vsyncadd %s770, %s778
          %s780 = smul.addr %s25, 8
          %s781 = smul.addr %s780, 128
          %s782 = scalar_lea.hbm %s6, %s781
          %s783 = sshll.u32 %s773, 4
          %s784 = int_to_ptr.vmem [resolvable:$true] %s783
          %789 = dma.vmem_to_hbm [thread:$0]  %s784, 1024, %s782, %s770, 256, 256, 16
        $region68: #{tpu_custom_call.1} parent=43 // pred_fallthru
          _
      $region44: #{tpu_custom_call.1} parent=5 // pred_fallthru
        _
      %p790 = scmp.le.s32.totalorder 2, %s20
      // Predicated region
      $region69: #{tpu_custom_call.1} parent=5 // pred_check
        %p791 = pneg %p790
      $region70: #{tpu_custom_call.1} parent=5 // pred_check_branch
        %793 = sbr.rel (%p791) target = $region72
      $region71: #{tpu_custom_call.1} parent=5 // pred_region
        %s794 = ssub.s32 %s20, 2
        // Predicated region
        $region73: #{tpu_custom_call.1} parent=71 // pred_check
          %p795 = pneg %p180
        $region74: #{tpu_custom_call.1} parent=71 // pred_check_branch
          %797 = sbr.rel (%p795) target = $region76
        $region75: #{tpu_custom_call.1} parent=71 // pred_region
          %s798 = sand.u32 %s165, 1
          %s799 = scalar_lea.sflag [#allocation4], %s798
          %s800 = sand.u32 %s165, 1
          %s801 = smul.addr %s800, 64
          %s802 = scalar_lea.vmem [#allocation11], %s801
          %803 = dma.done %s799, 1024
        $region76: #{tpu_custom_call.1} parent=71 // pred_fallthru
          _
      $region72: #{tpu_custom_call.1} parent=5 // pred_fallthru
        _
    $region6: #{tpu_custom_call.1} parent=1 // loop_footer
      %s24 = sadd.s32 1, %s20
    $region7: #{tpu_custom_call.1} parent=1 // loop_footer_branch
      %19 = sbr.rel target = $region3
    $region8: #{tpu_custom_call.1} parent=1 // loop_exit
      _
    %804 = vsyncpa [#allocation3], 1
    %s805 = scalar_lea.sflag [#allocation3], 1
    %806 = vsyncpa %s805, 1
    %807 = vsyncpa [#allocation6], 1
    %808 = vsyncpa [#allocation9], 1
    %809 = vsyncpa [#allocation4], 1
    %s810 = scalar_lea.sflag [#allocation4], 1
    %811 = vsyncpa %s810, 1

</llo_original>
